<compile_context>
chip_gen: v6e
topology: v6e:2x2x1
jax: 0.10.0
libtpu: 0.0.40
codegen_flags: <defaults>
</compile_context>

<pallas_src>
import numpy as np
import jax
import jax.numpy as jnp
from jax.experimental import pallas as pl
from jax.experimental.pallas import tpu as pltpu

# ----------------------------- example config ------------------------------
B = 16                      # batch (any value works; wrapper pads to 2 blocks)
ENCODED_DIMS = 32
HIDDEN = 16                 # hidden_dims[0]; int(sqrt(HIDDEN)) must be exact
S = 4                       # int(HIDDEN ** 0.5): spatial size after reshape
N_T, N_F = 8, 8             # Upsample target (output spatial dims)
N_C = 1                     # torch reshape requires n_c == 1
N_S_O = 4                   # == decoder_channels[0]
CH = (4, 8, 8, 3)           # decoder_channels
KH = KW = 3                 # decoder_filter_shapes (odd -> symmetric 'same')


# ------------------------------ Pallas kernel ------------------------------
def _decoder_kernel(x_ref, a1_ref, a2_ref, a3_ref, a4_ref, a5_ref, o_ref):
    f32 = jnp.float32
    h = x_ref[0]                                                  # (Bblk, E+1)
    # linear_1 + ReLU (bias folded; trailing lane stays 1 through ReLU)
    h = jnp.maximum(jnp.dot(h, a1_ref[...], preferred_element_type=f32), 0.0)
    # linear_2 + ReLU  (output order == torch reshape (n_s_o, s, s) flat)
    h = jnp.maximum(jnp.dot(h, a2_ref[...], preferred_element_type=f32), 0.0)
    # Conv2d block 1 ('same') + ReLU
    h = jnp.maximum(jnp.dot(h, a3_ref[...], preferred_element_type=f32), 0.0)
    # nearest Upsample -> Conv2d block 2 ('same') + ReLU
    h = jnp.maximum(jnp.dot(h, a4_ref[...], preferred_element_type=f32), 0.0)
    # (identity) Upsample -> Conv2d block 3 ('same'), output in (n_t,n_f,c3)
    z = jnp.dot(h, a5_ref[...], preferred_element_type=f32)
    # Sigmoid via tanh (EUP) instead of an f32 VPU divide.
    o_ref[...] = (0.5 * jnp.tanh(0.5 * z) + 0.5)[None]


# --------------------- host-side weight restructuring -----------------------
def _upsample_nearest(d, size):
    hi, wi = d.shape[2], d.shape[3]
    ho, wo = size
    ridx = (jnp.arange(ho) * hi) // ho
    cidx = (jnp.arange(wo) * wi) // wo
    return d[:, :, ridx, :][:, :, :, cidx]


def _conv_same(d, w, b=None):
    y = jax.lax.conv_general_dilated(
        d, w, window_strides=(1, 1), padding="SAME",
        dimension_numbers=("NCHW", "OIHW", "NCHW"),
        precision=jax.lax.Precision.HIGHEST)
    if b is not None:
        y = y + b[None, :, None, None]
    return y


def _linear_map_matrix(fn, in_shape):
    """Materialize the dense matrix of a linear map by applying it to an
    identity batch (exact; all shapes here are tiny)."""
    k = int(np.prod(in_shape))
    eye = jnp.eye(k, dtype=jnp.float32).reshape((k,) + tuple(in_shape))
    return np.asarray(fn(eye).reshape(k, -1), np.float32)


def _augment(mat, bias, carry_one):
    """[[W, 0], [b, 1]]: a trailing all-ones activation lane performs the bias
    add inside the matmul; ReLU(1) == 1 keeps the lane alive for the next."""
    mat = np.asarray(mat, np.float32)
    bias = np.asarray(bias, np.float32)
    k, n = mat.shape
    a = np.zeros((k + 1, n + (1 if carry_one else 0)), np.float32)
    a[:k, :n] = mat
    a[k, :n] = bias
    if carry_one:
        a[k, n] = 1.0
    return a


def build_decoder_operands(params):
    (w1, b1, w2, b2, cw1, cb1, cw2, cb2, cw3, cb3) = params
    c0, c1, c2, c3 = CH

    # Block 1: Conv2d(c0->c1, 'same') on the s x s map; NCHW-flat in/out, so
    # the torch reshape needs no extra permutation (linear_2 order is reused).
    m_a = _linear_map_matrix(lambda d: _conv_same(d, cw1), (c0, S, S))
    bias_a = np.repeat(np.asarray(cb1, np.float32), S * S)

    # Block 2: nearest Upsample (s,s)->(n_t,n_f) folded with Conv2d(c1->c2).
    m_b = _linear_map_matrix(
        lambda d: _conv_same(_upsample_nearest(d, (N_T, N_F)), cw2),
        (c1, S, S))
    bias_b = np.repeat(np.asarray(cb2, np.float32), N_T * N_F)

    # Block 3: (identity) Upsample folded with Conv2d(c2->c3); emitted directly
    # in (n_t, n_f, c3) order == the final permuted output layout.
    m_c = _linear_map_matrix(
        lambda d: jnp.transpose(
            _conv_same(_upsample_nearest(d, (N_T, N_F)), cw3), (0, 2, 3, 1)),
        (c2, N_T, N_F))
    bias_c = np.tile(np.asarray(cb3, np.float32), N_T * N_F)

    a1 = _augment(w1, b1, True)            # (E+1, H+1)
    a2 = _augment(w2, b2, True)            # (H+1, s*s*c0 + 1)
    a3 = _augment(m_a, bias_a, True)       # (65, 129)
    a4 = _augment(m_b, bias_b, True)       # (129, 513)
    a5 = _augment(m_c, bias_c, False)      # (513, 192)
    return tuple(jnp.asarray(a) for a in (a1, a2, a3, a4, a5))


# --------------------------------- wrapper ----------------------------------
def cnn_decoder_forward(x, operands):
    a1, a2, a3, a4, a5 = operands
    b, e = x.shape
    c3 = CH[-1]
    n_out = N_T * N_F * c3

    # Two "parallel" batch blocks: one per v7x TensorCore; only 2 serial grid
    # steps on single-TC v5e/v6e.  Cap rows per block for very large batches.
    n_blocks = 2
    b_blk = -(-b // n_blocks)
    while b_blk > 256:
        n_blocks += 2
        b_blk = -(-b // n_blocks)
    b_pad = n_blocks * b_blk

    x_aug = jnp.concatenate(
        [x.astype(jnp.float32), jnp.ones((b, 1), jnp.float32)], axis=1)
    x_aug = jnp.pad(x_aug, ((0, b_pad - b), (0, 0)))
    x3 = x_aug.reshape(n_blocks, b_blk, e + 1)

    def wspec(arr):
        return pl.BlockSpec(tuple(arr.shape), lambda i: (0, 0))

    out3 = pl.pallas_call(
        _decoder_kernel,
        out_shape=jax.ShapeDtypeStruct((n_blocks, b_blk, n_out), jnp.float32),
        grid=(n_blocks,),
        in_specs=[pl.BlockSpec((1, b_blk, e + 1), lambda i: (i, 0, 0)),
                  wspec(a1), wspec(a2), wspec(a3), wspec(a4), wspec(a5)],
        out_specs=pl.BlockSpec((1, b_blk, n_out), lambda i: (i, 0, 0)),
        compiler_params=pltpu.CompilerParams(
            dimension_semantics=("parallel",)),
    )(x3, a1, a2, a3, a4, a5)

    # torch.unsqueeze(.., 2) + permute(0, 3, 4, 2, 1) -> (B, n_t, n_f, 1, C)
    out = out3.reshape(b_pad, N_T, N_F, c3)[:b]
    return out[:, :, :, None, :]


# ---------------------------- pure-JAX reference ----------------------------
def reference_forward(x, params):
    (w1, b1, w2, b2, cw1, cb1, cw2, cb2, cw3, cb3) = params
    hp = jax.lax.Precision.HIGHEST
    h = jnp.maximum(jnp.dot(x, w1, precision=hp) + b1, 0.0)
    z = jnp.maximum(jnp.dot(h, w2, precision=hp) + b2, 0.0)
    d = z.reshape(x.shape[0], N_S_O, S, S)
    d = _upsample_nearest(jnp.maximum(_conv_same(d, cw1, cb1), 0.0), (N_T, N_F))
    d = _upsample_nearest(jnp.maximum(_conv_same(d, cw2, cb2), 0.0), (N_T, N_F))
    d = jax.nn.sigmoid(_conv_same(d, cw3, cb3))
    d = d[:, :, None, :, :]                        # torch.unsqueeze(.., 2)
    return jnp.transpose(d, (0, 3, 4, 2, 1))       # (B, n_t, n_f, 1, C_out)


# ----------------------------------- main ------------------------------------
if __name__ == "__main__":
    key = jax.random.PRNGKey(0)
    ks = jax.random.split(key, 11)
    c0, c1, c2, c3 = CH

    def init(k, shape, fan_in):
        return jax.random.normal(k, shape, jnp.float32) / np.sqrt(fan_in)

    params = (
        init(ks[0], (ENCODED_DIMS, HIDDEN), ENCODED_DIMS),        # linear_1 W
        init(ks[1], (HIDDEN,), HIDDEN),                           # linear_1 b
        init(ks[2], (HIDDEN, HIDDEN * N_S_O * N_C), HIDDEN),      # linear_2 W
        init(ks[3], (HIDDEN * N_S_O * N_C,), HIDDEN),             # linear_2 b
        init(ks[4], (c1, c0, KH, KW), c0 * KH * KW),              # conv1 W
        init(ks[5], (c1,), c0 * KH * KW),                         # conv1 b
        init(ks[6], (c2, c1, KH, KW), c1 * KH * KW),              # conv2 W
        init(ks[7], (c2,), c1 * KH * KW),                         # conv2 b
        init(ks[8], (c3, c2, KH, KW), c2 * KH * KW),              # conv3 W
        init(ks[9], (c3,), c2 * KH * KW),                         # conv3 b
    )
    x = jax.random.normal(ks[10], (B, ENCODED_DIMS), jnp.float32)

    operands = build_decoder_operands(params)
    out = cnn_decoder_forward(x, operands)
    out = jax.block_until_ready(out)

    ref = reference_forward(x, params)
    assert out.shape == (B, N_T, N_F, 1, CH[-1]), out.shape
    assert jnp.allclose(out, ref, rtol=2e-3, atol=2e-3), (
        float(jnp.max(jnp.abs(out - ref))))

    print("KERNEL_OK")
</pallas_src>

<mosaic_0001>
module attributes {stable_mosaic.version = 11 : i64} {
  func.func @_decoder_kernel(%arg0: i32, %arg1: memref<1x8x33xf32, #tpu.memory_space<vmem>>, %arg2: memref<33x17xf32, #tpu.memory_space<vmem>>, %arg3: memref<17x65xf32, #tpu.memory_space<vmem>>, %arg4: memref<65x129xf32, #tpu.memory_space<vmem>>, %arg5: memref<129x513xf32, #tpu.memory_space<vmem>>, %arg6: memref<513x192xf32, #tpu.memory_space<vmem>>, %arg7: memref<1x8x192xf32, #tpu.memory_space<vmem>>) attributes {dimension_semantics = [#tpu.dimension_semantics<parallel>], iteration_bounds = array<i64: 2>, scalar_prefetch = 0 : i64, scratch_operands = 0 : i64, tpu.core_type = #tpu.core_type<tc>, window_params = [{transform_indices = @transform_0, window_bounds = array<i64: 1, 8, 33>}, {pipeline_mode = #tpu.pipeline_mode<synchronous>, transform_indices = @transform_1, window_bounds = array<i64: 33, 17>}, {pipeline_mode = #tpu.pipeline_mode<synchronous>, transform_indices = @transform_2, window_bounds = array<i64: 17, 65>}, {pipeline_mode = #tpu.pipeline_mode<synchronous>, transform_indices = @transform_3, window_bounds = array<i64: 65, 129>}, {pipeline_mode = #tpu.pipeline_mode<synchronous>, transform_indices = @transform_4, window_bounds = array<i64: 129, 513>}, {pipeline_mode = #tpu.pipeline_mode<synchronous>, transform_indices = @transform_5, window_bounds = array<i64: 513, 192>}, {transform_indices = @transform_6, window_bounds = array<i64: 1, 8, 192>}]} {
    %c0 = arith.constant 0 : index
    %c0_0 = arith.constant 0 : index
    %c0_1 = arith.constant 0 : index
    %0 = vector.load %arg1[%c0, %c0_0, %c0_1] : memref<1x8x33xf32, #tpu.memory_space<vmem>>, vector<1x8x33xf32>
    %1 = vector.shape_cast %0 : vector<1x8x33xf32> to vector<8x33xf32>
    %c0_2 = arith.constant 0 : index
    %c0_3 = arith.constant 0 : index
    %2 = vector.load %arg2[%c0_2, %c0_3] : memref<33x17xf32, #tpu.memory_space<vmem>>, vector<33x17xf32>
    %cst = arith.constant dense<0.000000e+00> : vector<8x17xf32>
    %3 = tpu.matmul %1, %2, %cst {dimension_numbers = #tpu.dot_dimension_numbers<[1], [0], [0], [1], [0, 0, 1, 1], [], []>} : vector<8x33xf32>, vector<33x17xf32>, vector<8x17xf32> -> vector<8x17xf32>
    %cst_4 = arith.constant 0.000000e+00 : f32
    %4 = vector.broadcast %cst_4 : f32 to vector<8x17xf32>
    %5 = arith.maximumf %3, %4 : vector<8x17xf32>
    %c0_5 = arith.constant 0 : index
    %c0_6 = arith.constant 0 : index
    %6 = vector.load %arg3[%c0_5, %c0_6] : memref<17x65xf32, #tpu.memory_space<vmem>>, vector<17x65xf32>
    %cst_7 = arith.constant dense<0.000000e+00> : vector<8x65xf32>
    %7 = tpu.matmul %5, %6, %cst_7 {dimension_numbers = #tpu.dot_dimension_numbers<[1], [0], [0], [1], [0, 0, 1, 1], [], []>} : vector<8x17xf32>, vector<17x65xf32>, vector<8x65xf32> -> vector<8x65xf32>
    %cst_8 = arith.constant 0.000000e+00 : f32
    %8 = vector.broadcast %cst_8 : f32 to vector<8x65xf32>
    %9 = arith.maximumf %7, %8 : vector<8x65xf32>
    %c0_9 = arith.constant 0 : index
    %c0_10 = arith.constant 0 : index
    %10 = vector.load %arg4[%c0_9, %c0_10] : memref<65x129xf32, #tpu.memory_space<vmem>>, vector<65x129xf32>
    %cst_11 = arith.constant dense<0.000000e+00> : vector<8x129xf32>
    %11 = tpu.matmul %9, %10, %cst_11 {dimension_numbers = #tpu.dot_dimension_numbers<[1], [0], [0], [1], [0, 0, 1, 1], [], []>} : vector<8x65xf32>, vector<65x129xf32>, vector<8x129xf32> -> vector<8x129xf32>
    %cst_12 = arith.constant 0.000000e+00 : f32
    %12 = vector.broadcast %cst_12 : f32 to vector<8x129xf32>
    %13 = arith.maximumf %11, %12 : vector<8x129xf32>
    %c0_13 = arith.constant 0 : index
    %c0_14 = arith.constant 0 : index
    %14 = vector.load %arg5[%c0_13, %c0_14] : memref<129x513xf32, #tpu.memory_space<vmem>>, vector<129x513xf32>
    %cst_15 = arith.constant dense<0.000000e+00> : vector<8x513xf32>
    %15 = tpu.matmul %13, %14, %cst_15 {dimension_numbers = #tpu.dot_dimension_numbers<[1], [0], [0], [1], [0, 0, 1, 1], [], []>} : vector<8x129xf32>, vector<129x513xf32>, vector<8x513xf32> -> vector<8x513xf32>
    %cst_16 = arith.constant 0.000000e+00 : f32
    %16 = vector.broadcast %cst_16 : f32 to vector<8x513xf32>
    %17 = arith.maximumf %15, %16 : vector<8x513xf32>
    %c0_17 = arith.constant 0 : index
    %c0_18 = arith.constant 0 : index
    %18 = vector.load %arg6[%c0_17, %c0_18] : memref<513x192xf32, #tpu.memory_space<vmem>>, vector<513x192xf32>
    %cst_19 = arith.constant dense<0.000000e+00> : vector<8x192xf32>
    %19 = tpu.matmul %17, %18, %cst_19 {dimension_numbers = #tpu.dot_dimension_numbers<[1], [0], [0], [1], [0, 0, 1, 1], [], []>} : vector<8x513xf32>, vector<513x192xf32>, vector<8x192xf32> -> vector<8x192xf32>
    %cst_20 = arith.constant 5.000000e-01 : f32
    %20 = vector.broadcast %cst_20 : f32 to vector<8x192xf32>
    %21 = arith.mulf %20, %19 : vector<8x192xf32>
    %22 = math.tanh %21 : vector<8x192xf32>
    %cst_21 = arith.constant 5.000000e-01 : f32
    %23 = vector.broadcast %cst_21 : f32 to vector<8x192xf32>
    %24 = arith.mulf %23, %22 : vector<8x192xf32>
    %cst_22 = arith.constant 5.000000e-01 : f32
    %25 = vector.broadcast %cst_22 : f32 to vector<8x192xf32>
    %26 = arith.addf %24, %25 : vector<8x192xf32>
    %27 = vector.shape_cast %26 : vector<8x192xf32> to vector<1x8x192xf32>
    %c0_23 = arith.constant 0 : index
    %c0_24 = arith.constant 0 : index
    %c0_25 = arith.constant 0 : index
    %28 = vector.load %arg7[%c0_23, %c0_24, %c0_25] : memref<1x8x192xf32, #tpu.memory_space<vmem>>, vector<1x8x192xf32>
    tpu.vector_store %arg7[%c0_23, %c0_24, %c0_25], %27 {strides = array<i32>} : memref<1x8x192xf32, #tpu.memory_space<vmem>>, vector<1x8x192xf32>,
    return
  }
  func.func @transform_0(%arg0: i32) -> (i32, i32, i32) {
    %c0_i32 = arith.constant 0 : i32
    %c0_i32_0 = arith.constant 0 : i32
    %c0_i32_1 = arith.constant 0 : i32
    return %arg0, %c0_i32, %c0_i32_0 : i32, i32, i32
  }
  func.func @transform_1(%arg0: i32) -> (i32, i32) {
    %c0_i32 = arith.constant 0 : i32
    %c0_i32_0 = arith.constant 0 : i32
    %c0_i32_1 = arith.constant 0 : i32
    return %c0_i32, %c0_i32_0 : i32, i32
  }
  func.func @transform_2(%arg0: i32) -> (i32, i32) {
    %c0_i32 = arith.constant 0 : i32
    %c0_i32_0 = arith.constant 0 : i32
    %c0_i32_1 = arith.constant 0 : i32
    return %c0_i32, %c0_i32_0 : i32, i32
  }
  func.func @transform_3(%arg0: i32) -> (i32, i32) {
    %c0_i32 = arith.constant 0 : i32
    %c0_i32_0 = arith.constant 0 : i32
    %c0_i32_1 = arith.constant 0 : i32
    return %c0_i32, %c0_i32_0 : i32, i32
  }
  func.func @transform_4(%arg0: i32) -> (i32, i32) {
    %c0_i32 = arith.constant 0 : i32
    %c0_i32_0 = arith.constant 0 : i32
    %c0_i32_1 = arith.constant 0 : i32
    return %c0_i32, %c0_i32_0 : i32, i32
  }
  func.func @transform_5(%arg0: i32) -> (i32, i32) {
    %c0_i32 = arith.constant 0 : i32
    %c0_i32_0 = arith.constant 0 : i32
    %c0_i32_1 = arith.constant 0 : i32
    return %c0_i32, %c0_i32_0 : i32, i32
  }
  func.func @transform_6(%arg0: i32) -> (i32, i32, i32) {
    %c0_i32 = arith.constant 0 : i32
    %c0_i32_0 = arith.constant 0 : i32
    %c0_i32_1 = arith.constant 0 : i32
    return %arg0, %c0_i32, %c0_i32_0 : i32, i32, i32
  }
}

</mosaic_0001>

<llo_original>
// kernel: tpu_custom_call.1
$region0: #{tpu_custom_call.1}
  #allocation0 [shape = 'u32[]', space=smem, size = 0x4, offset = 0x4, fixed_abs, tag = 'smem constant byte address 0x4 - core index']
  #allocation1 [shape = 'u32[144,128]{1,0:T(1,128)}', space=vmem, size = 0x12000, scoped, tag = 'internal scratch']
  %s0 = inlined_call_operand.vmem [shape: f32[2,8,33], index: 0, kind: input, shape index: {}]
  %s1 = inlined_call_operand.vmem [shape: f32[33,17], index: 1, kind: input, shape index: {}]
  %s2 = inlined_call_operand.vmem [shape: f32[17,65], index: 2, kind: input, shape index: {}]
  %s3 = inlined_call_operand.vmem [shape: f32[65,129], index: 3, kind: input, shape index: {}]
  %s4 = inlined_call_operand.vmem [shape: f32[129,513], index: 4, kind: input, shape index: {}]
  %s5 = inlined_call_operand.vmem [shape: f32[513,192], index: 5, kind: input, shape index: {}]
  %s6 = inlined_call_operand.hbm [shape: f32[2,8,192], index: 6, kind: output, shape index: {}]
  %s7 = sld [smem:[#allocation0]]
  $region57: #{tpu_custom_call.1} parent=0
    _
  %s9 = ssub.s32 1, %s7
  %s10 = scalar_select 0, %s9, %s7
  $region1: #{tpu_custom_call.1} parent=0
    #allocation2 [shape = 'u8[16384]{0}', space=vmem, size = 0x4000, scoped, tag = 'output window, operand 0']
    #allocation3 [shape = 's32[2]{0}', space=sflag, size = 0x8, scoped, tag = 'scoped memory for tpu_custom_call.1']
    %11 = vsyncpa [#allocation3], 0
    %s12 = scalar_lea.sflag [#allocation3], 1
    %13 = vsyncpa %s12, 0
    loop: start=0, step=1, limit=4
    $region2: #{tpu_custom_call.1} parent=1 // loop_pre_header
      _
    $region3: #{tpu_custom_call.1} parent=1 // loop_header
      %s15 = sphi 0, %s19
      %p16 = scmp.ge.s32.totalorder %s15, 4
      %s25 = sphi 0, %s27
      %s28 = sphi 0, %s25
      %s29 = sphi 0, %s28
      %s45 = sphi 0, %s29
      %s49 = sphi 0, %s49
      %s51 = sphi 0, %s49
      %s52 = sphi 0, %s51
      %s66 = sphi 0, %s52
      %s70 = sphi 0, %s70
      %s72 = sphi 0, %s70
      %s73 = sphi 0, %s72
      %s87 = sphi 0, %s73
      %s91 = sphi 0, %s91
      %s93 = sphi 0, %s91
      %s94 = sphi 0, %s93
      %s108 = sphi 0, %s94
      %s112 = sphi 0, %s112
      %s114 = sphi 0, %s112
      %s115 = sphi 0, %s114
      %s129 = sphi 0, %s115
      %s133 = sphi 0, %s133
      %s135 = sphi 0, %s133
      %s136 = sphi 0, %s135
      %s150 = sphi 0, %s136
      %s156 = sphi 0, %s158
      %s159 = sphi 0, %s156
      %s160 = sphi 0, %s159
      %s176 = sphi 0, %s160
    $region4: #{tpu_custom_call.1} parent=1 // loop_header_branch
      %18 = sbr.rel (%p16) target = $region8
    $region5: #{tpu_custom_call.1} parent=1 // loop_body
      %s20 = ssub.s32 %s15, 1
      %s21 = ssub.s32 %s15, 2
      %s22 = sadd.s32 %s15, 1
      %s23 = ssub.s32 %s15, %s22
      %p24 = scmp.eq.s32.totalorder %s23, 0
      %s26 = sadd.s32 %s25, 1
      %s27 = scalar_select %p24, %s25, %s26
      %p30 = pneg %p24
      %p31 = scmp.eq.s32.totalorder %s15, 1
      %p32 = por %p30, %p31
      %p33 = scmp.ne.s32.totalorder %s25, %s28
      %p34 = scmp.eq.s32.totalorder %s15, 0
      %p35 = por %p33, %p34
      %p36 = scmp.ne.s32.totalorder %s25, %s28
      %p37 = scmp.eq.s32.totalorder %s20, 1
      %p38 = por %p36, %p37
      %p39 = scmp.ne.s32.totalorder %s28, %s29
      %p40 = scmp.eq.s32.totalorder %s20, 0
      %p41 = por %p39, %p40
      %p42 = scmp.ne.s32.totalorder %s28, %s29
      %p43 = scmp.eq.s32.totalorder %s21, 1
      %p44 = por %p42, %p43
      %p46 = scmp.ne.s32.totalorder %s29, %s45
      %p47 = scmp.eq.s32.totalorder %s21, 0
      %p48 = por %p46, %p47
      %s50 = sadd.s32 %s49, 1
      %p53 = scmp.eq.s32.totalorder %s15, 1
      %p54 = scmp.ne.s32.totalorder %s49, %s51
      %p55 = scmp.eq.s32.totalorder %s15, 0
      %p56 = por %p54, %p55
      %p57 = scmp.ne.s32.totalorder %s49, %s51
      %p58 = scmp.eq.s32.totalorder %s20, 1
      %p59 = por %p57, %p58
      %p60 = scmp.ne.s32.totalorder %s51, %s52
      %p61 = scmp.eq.s32.totalorder %s20, 0
      %p62 = por %p60, %p61
      %p63 = scmp.ne.s32.totalorder %s51, %s52
      %p64 = scmp.eq.s32.totalorder %s21, 1
      %p65 = por %p63, %p64
      %p67 = scmp.ne.s32.totalorder %s52, %s66
      %p68 = scmp.eq.s32.totalorder %s21, 0
      %p69 = por %p67, %p68
      %s71 = sadd.s32 %s70, 1
      %p74 = scmp.eq.s32.totalorder %s15, 1
      %p75 = scmp.ne.s32.totalorder %s70, %s72
      %p76 = scmp.eq.s32.totalorder %s15, 0
      %p77 = por %p75, %p76
      %p78 = scmp.ne.s32.totalorder %s70, %s72
      %p79 = scmp.eq.s32.totalorder %s20, 1
      %p80 = por %p78, %p79
      %p81 = scmp.ne.s32.totalorder %s72, %s73
      %p82 = scmp.eq.s32.totalorder %s20, 0
      %p83 = por %p81, %p82
      %p84 = scmp.ne.s32.totalorder %s72, %s73
      %p85 = scmp.eq.s32.totalorder %s21, 1
      %p86 = por %p84, %p85
      %p88 = scmp.ne.s32.totalorder %s73, %s87
      %p89 = scmp.eq.s32.totalorder %s21, 0
      %p90 = por %p88, %p89
      %s92 = sadd.s32 %s91, 1
      %p95 = scmp.eq.s32.totalorder %s15, 1
      %p96 = scmp.ne.s32.totalorder %s91, %s93
      %p97 = scmp.eq.s32.totalorder %s15, 0
      %p98 = por %p96, %p97
      %p99 = scmp.ne.s32.totalorder %s91, %s93
      %p100 = scmp.eq.s32.totalorder %s20, 1
      %p101 = por %p99, %p100
      %p102 = scmp.ne.s32.totalorder %s93, %s94
      %p103 = scmp.eq.s32.totalorder %s20, 0
      %p104 = por %p102, %p103
      %p105 = scmp.ne.s32.totalorder %s93, %s94
      %p106 = scmp.eq.s32.totalorder %s21, 1
      %p107 = por %p105, %p106
      %p109 = scmp.ne.s32.totalorder %s94, %s108
      %p110 = scmp.eq.s32.totalorder %s21, 0
      %p111 = por %p109, %p110
      %s113 = sadd.s32 %s112, 1
      %p116 = scmp.eq.s32.totalorder %s15, 1
      %p117 = scmp.ne.s32.totalorder %s112, %s114
      %p118 = scmp.eq.s32.totalorder %s15, 0
      %p119 = por %p117, %p118
      %p120 = scmp.ne.s32.totalorder %s112, %s114
      %p121 = scmp.eq.s32.totalorder %s20, 1
      %p122 = por %p120, %p121
      %p123 = scmp.ne.s32.totalorder %s114, %s115
      %p124 = scmp.eq.s32.totalorder %s20, 0
      %p125 = por %p123, %p124
      %p126 = scmp.ne.s32.totalorder %s114, %s115
      %p127 = scmp.eq.s32.totalorder %s21, 1
      %p128 = por %p126, %p127
      %p130 = scmp.ne.s32.totalorder %s115, %s129
      %p131 = scmp.eq.s32.totalorder %s21, 0
      %p132 = por %p130, %p131
      %s134 = sadd.s32 %s133, 1
      %p137 = scmp.eq.s32.totalorder %s15, 1
      %p138 = scmp.ne.s32.totalorder %s133, %s135
      %p139 = scmp.eq.s32.totalorder %s15, 0
      %p140 = por %p138, %p139
      %p141 = scmp.ne.s32.totalorder %s133, %s135
      %p142 = scmp.eq.s32.totalorder %s20, 1
      %p143 = por %p141, %p142
      %p144 = scmp.ne.s32.totalorder %s135, %s136
      %p145 = scmp.eq.s32.totalorder %s20, 0
      %p146 = por %p144, %p145
      %p147 = scmp.ne.s32.totalorder %s135, %s136
      %p148 = scmp.eq.s32.totalorder %s21, 1
      %p149 = por %p147, %p148
      %p151 = scmp.ne.s32.totalorder %s136, %s150
      %p152 = scmp.eq.s32.totalorder %s21, 0
      %p153 = por %p151, %p152
      %s154 = ssub.s32 %s15, %s22
      %p155 = scmp.eq.s32.totalorder %s154, 0
      %s157 = sadd.s32 %s156, 1
      %s158 = scalar_select %p155, %s156, %s157
      %p161 = pneg %p155
      %p162 = scmp.eq.s32.totalorder %s15, 1
      %p163 = por %p161, %p162
      %p164 = scmp.ne.s32.totalorder %s156, %s159
      %p165 = scmp.eq.s32.totalorder %s15, 0
      %p166 = por %p164, %p165
      %p167 = scmp.ne.s32.totalorder %s156, %s159
      %p168 = scmp.eq.s32.totalorder %s20, 1
      %p169 = por %p167, %p168
      %p170 = scmp.ne.s32.totalorder %s159, %s160
      %p171 = scmp.eq.s32.totalorder %s20, 0
      %p172 = por %p170, %p171
      %p173 = scmp.ne.s32.totalorder %s159, %s160
      %p174 = scmp.eq.s32.totalorder %s21, 1
      %p175 = por %p173, %p174
      %p177 = scmp.ne.s32.totalorder %s160, %s176
      %p178 = scmp.eq.s32.totalorder %s21, 0
      %p179 = por %p177, %p178
      %p180 = scmp.le.s32.totalorder 1, %s15
      %p181 = scmp.lt.s32.totalorder %s15, 3
      %p182 = pnand %p180, %p181
      %p183 = pneg %p182
      // Predicated region
      $region9: #{tpu_custom_call.1} parent=5 // pred_check
        _
      $region10: #{tpu_custom_call.1} parent=5 // pred_check_branch
        %185 = sbr.rel (%p182) target = $region12
      $region11: #{tpu_custom_call.1} parent=5 // pred_region
        %s186 = ssub.s32 %s15, 1
        // Predicated region
        $region13: #{tpu_custom_call.1} parent=11 // pred_check
          %p187 = pneg %p62
        $region14: #{tpu_custom_call.1} parent=11 // pred_check_branch
          %189 = sbr.rel (%p187) target = $region16
        $region15: #{tpu_custom_call.1} parent=11 // pred_region
          _
        $region16: #{tpu_custom_call.1} parent=11 // pred_fallthru
          _
        // Predicated region
        $region17: #{tpu_custom_call.1} parent=11 // pred_check
          %p190 = pneg %p83
        $region18: #{tpu_custom_call.1} parent=11 // pred_check_branch
          %192 = sbr.rel (%p190) target = $region20
        $region19: #{tpu_custom_call.1} parent=11 // pred_region
          _
        $region20: #{tpu_custom_call.1} parent=11 // pred_fallthru
          _
        // Predicated region
        $region21: #{tpu_custom_call.1} parent=11 // pred_check
          %p193 = pneg %p104
        $region22: #{tpu_custom_call.1} parent=11 // pred_check_branch
          %195 = sbr.rel (%p193) target = $region24
        $region23: #{tpu_custom_call.1} parent=11 // pred_region
          _
        $region24: #{tpu_custom_call.1} parent=11 // pred_fallthru
          _
        // Predicated region
        $region25: #{tpu_custom_call.1} parent=11 // pred_check
          %p196 = pneg %p125
        $region26: #{tpu_custom_call.1} parent=11 // pred_check_branch
          %198 = sbr.rel (%p196) target = $region28
        $region27: #{tpu_custom_call.1} parent=11 // pred_region
          _
        $region28: #{tpu_custom_call.1} parent=11 // pred_fallthru
          _
        // Predicated region
        $region29: #{tpu_custom_call.1} parent=11 // pred_check
          %p199 = pneg %p146
        $region30: #{tpu_custom_call.1} parent=11 // pred_check_branch
          %201 = sbr.rel (%p199) target = $region32
        $region31: #{tpu_custom_call.1} parent=11 // pred_region
          _
        $region32: #{tpu_custom_call.1} parent=11 // pred_fallthru
          _
      $region12: #{tpu_custom_call.1} parent=5 // pred_fallthru
        _
      %p202 = scmp.lt.s32.totalorder %s15, 2
      // Predicated region
      $region33: #{tpu_custom_call.1} parent=5 // pred_check
        %p203 = pneg %p202
      $region34: #{tpu_custom_call.1} parent=5 // pred_check_branch
        %205 = sbr.rel (%p203) target = $region36
      $region35: #{tpu_custom_call.1} parent=5 // pred_region
        // Predicated region
        $region37: #{tpu_custom_call.1} parent=35 // pred_check
          %p206 = pneg %p35
        $region38: #{tpu_custom_call.1} parent=35 // pred_check_branch
          %208 = sbr.rel (%p206) target = $region40
        $region39: #{tpu_custom_call.1} parent=35 // pred_region
          %p209 = scmp.lt.s32.totalorder %s15, 1
          %s210 = scalar_select %p209, %s15, 1
          %s211 = smul.addr %s210, 8
          %s212 = scalar_lea.vmem %s0, %s211
        $region40: #{tpu_custom_call.1} parent=35 // pred_fallthru
          _
      $region36: #{tpu_custom_call.1} parent=5 // pred_fallthru
        _
      %p213 = scmp.le.s32.totalorder 1, %s15
      %p214 = scmp.lt.s32.totalorder %s15, 3
      %p215 = pnand %p213, %p214
      %p216 = pneg %p215
      // Predicated region
      $region41: #{tpu_custom_call.1} parent=5 // pred_check
        _
      $region42: #{tpu_custom_call.1} parent=5 // pred_check_branch
        %218 = sbr.rel (%p215) target = $region44
      $region43: #{tpu_custom_call.1} parent=5 // pred_region
        %s219 = ssub.s32 %s15, 1
        %p220 = scmp.lt.s32.totalorder %s20, 1
        %s221 = scalar_select %p220, %s20, 1
        %s222 = smul.addr %s221, 8
        %s223 = scalar_lea.vmem %s0, %s222
        %p224 = pneg %p41
        %p225 = pneg %p38
        %p226 = pneg %p62
        %p227 = pneg %p59
        %p228 = pneg %p83
        %p229 = pneg %p80
        %p230 = pneg %p104
        %p231 = pneg %p101
        %p232 = pneg %p125
        %p233 = pneg %p122
        %p234 = pneg %p146
        %p235 = pneg %p143
        %p236 = pneg %p172
        %p237 = pneg %p169
        %s238 = sand.u32 %s159, 1
        %s239 = scalar_lea.sflag [#allocation3], %s238
        %s240 = sand.u32 %s159, 1
        %s241 = smul.addr %s240, 16
        %s242 = scalar_lea.vmem [#allocation2], %s241
        %p243 = scmp.lt.s32.totalorder %s20, 1
        %s244 = scalar_select %p243, %s20, 1
        %s245 = smul.addr %s244, 8
        %s246 = scalar_lea.vmem %s0, %s245
        %v247 = vld [vmem:[%s246] sm:$0xff]
        %v248 = vld [vmem:[%s1] sm:$0xff]
        %v249 = vld [vmem:[%s1 + $0x8] sm:$0xff]
        %v250 = vld [vmem:[%s1 + $0x10] sm:$0xff]
        %v251 = vld [vmem:[%s1 + $0x18] sm:$0xff]
        %v252 = vld [vmem:[%s1 + $0x20] sm:$0x1]
        %vm253 = vcmask 269312
        %v255 = vsel %vm253, %v247, 0
        %vm257 = vcmask 1040384
        %v259 = vsel %vm257, %v252, 0
        %261 = vmatprep.subr.mxu0 0.0
        %262 = vmatpush1.msra.mxu0 0.0
        %263 = vmatprep.subr.mxu0 0.0
        %264 = vmatpush1.msra.mxu0 0.0
        %265 = vmatprep.subr.mxu0 0.0
        %266 = vmatpush1.msra.mxu0 0.0
        %267 = vmatprep.subr.mxu0 0.0
        %268 = vmatpush1.msra.mxu0 0.0
        %269 = vmatprep.subr.mxu0 0.0
        %270 = vmatpush1.msra.mxu0 0.0
        %271 = vmatprep.subr.mxu0 0.0
        %272 = vmatpush1.msra.mxu0 0.0
        %273 = vmatprep.subr.mxu0 0.0
        %274 = vmatpush1.msra.mxu0 0.0
        %275 = vmatprep.subr.mxu0 0.0
        %276 = vmatpush1.msra.mxu0 0.0
        %277 = vmatprep.subr.mxu0 0.0
        %278 = vmatpush1.msra.mxu0 0.0
        %279 = vmatprep.subr.mxu0 0.0
        %280 = vmatpush1.msra.mxu0 0.0
        %281 = vmatprep.subr.mxu0 0.0
        %282 = vmatpush1.msra.mxu0 0.0
        %283 = vmatprep.subr.mxu0 0.0
        %284 = vmatpush1.msra.mxu0 %v259
        %285 = vmatprep.subr.mxu0 0.0
        %286 = vmatpush1.msra.mxu0 %v251
        %287 = vmatprep.subr.mxu0 0.0
        %288 = vmatpush1.msra.mxu0 %v250
        %289 = vmatprep.subr.mxu0 0.0
        %290 = vmatpush1.msra.mxu0 %v249
        %291 = vmatprep.subr.mxu0 0.0
        %292 = vmatpush1.msra.mxu0 %v248
        %293 = vmatprep.subr.mxu0 0.0
        %294 = vmatpush2.msra.mxu0 0.0
        %295 = vmatprep.subr.mxu0 0.0
        %296 = vmatpush2.msra.mxu0 0.0
        %297 = vmatprep.subr.mxu0 0.0
        %298 = vmatpush2.msra.mxu0 0.0
        %299 = vmatprep.subr.mxu0 0.0
        %300 = vmatpush2.msra.mxu0 0.0
        %301 = vmatprep.subr.mxu0 0.0
        %302 = vmatpush2.msra.mxu0 0.0
        %303 = vmatprep.subr.mxu0 0.0
        %304 = vmatpush2.msra.mxu0 0.0
        %305 = vmatprep.subr.mxu0 0.0
        %306 = vmatpush2.msra.mxu0 0.0
        %307 = vmatprep.subr.mxu0 0.0
        %308 = vmatpush2.msra.mxu0 0.0
        %309 = vmatprep.subr.mxu0 0.0
        %310 = vmatpush2.msra.mxu0 0.0
        %311 = vmatprep.subr.mxu0 0.0
        %312 = vmatpush2.msra.mxu0 0.0
        %313 = vmatprep.subr.mxu0 0.0
        %314 = vmatpush2.msra.mxu0 0.0
        %315 = vmatprep.subr.mxu0 0.0
        %316 = vmatpush2.msra.mxu0 0.0
        %317 = vmatprep.subr.mxu0 0.0
        %318 = vmatpush2.msra.mxu0 0.0
        %319 = vmatprep.subr.mxu0 0.0
        %320 = vmatpush2.msra.mxu0 0.0
        %321 = vmatprep.subr.mxu0 0.0
        %322 = vmatpush2.msra.mxu0 0.0
        %323 = vmatprep.subr.mxu0 0.0
        %324 = vmatpush2.msra.mxu0 0.0
        %325 = vmatprep.mubr.f32.mxu0 0.0
        %326 = vmatmul.mubr.f32.gmra.mxu0 %v255
        %v327 = vpop.f32.mrf.mxu0
        %v328 = vadd.f32 0.0, %v327
        %v329 = vpop.f32.mrf.mxu0
        %330 = vdwg.mxu0
        %v331 = vmax.f32 %v328, 0.0
        %v332 = vld [vmem:[%s2] sm:$0xff]
        %v333 = vld [vmem:[%s2 + $0x8] sm:$0xff]
        %v334 = vld [vmem:[%s2 + $0x10] sm:$0x1]
        %vm335 = vcmask 138240
        %v337 = vsel %vm335, %v331, 0
        %v340 = vsel %vm257, %v334, 0
        %342 = vmatprep.subr.mxu0 0.0
        %343 = vmatpush1.msra.mxu0 0.0
        %344 = vmatprep.subr.mxu0 0.0
        %345 = vmatpush1.msra.mxu0 0.0
        %346 = vmatprep.subr.mxu0 0.0
        %347 = vmatpush1.msra.mxu0 0.0
        %348 = vmatprep.subr.mxu0 0.0
        %349 = vmatpush1.msra.mxu0 0.0
        %350 = vmatprep.subr.mxu0 0.0
        %351 = vmatpush1.msra.mxu0 0.0
        %352 = vmatprep.subr.mxu0 0.0
        %353 = vmatpush1.msra.mxu0 0.0
        %354 = vmatprep.subr.mxu0 0.0
        %355 = vmatpush1.msra.mxu0 0.0
        %356 = vmatprep.subr.mxu0 0.0
        %357 = vmatpush1.msra.mxu0 0.0
        %358 = vmatprep.subr.mxu0 0.0
        %359 = vmatpush1.msra.mxu0 0.0
        %360 = vmatprep.subr.mxu0 0.0
        %361 = vmatpush1.msra.mxu0 0.0
        %362 = vmatprep.subr.mxu0 0.0
        %363 = vmatpush1.msra.mxu0 0.0
        %364 = vmatprep.subr.mxu0 0.0
        %365 = vmatpush1.msra.mxu0 0.0
        %366 = vmatprep.subr.mxu0 0.0
        %367 = vmatpush1.msra.mxu0 0.0
        %368 = vmatprep.subr.mxu0 0.0
        %369 = vmatpush1.msra.mxu0 %v340
        %370 = vmatprep.subr.mxu0 0.0
        %371 = vmatpush1.msra.mxu0 %v333
        %372 = vmatprep.subr.mxu0 0.0
        %373 = vmatpush1.msra.mxu0 %v332
        %374 = vmatprep.subr.mxu0 0.0
        %375 = vmatpush2.msra.mxu0 0.0
        %376 = vmatprep.subr.mxu0 0.0
        %377 = vmatpush2.msra.mxu0 0.0
        %378 = vmatprep.subr.mxu0 0.0
        %379 = vmatpush2.msra.mxu0 0.0
        %380 = vmatprep.subr.mxu0 0.0
        %381 = vmatpush2.msra.mxu0 0.0
        %382 = vmatprep.subr.mxu0 0.0
        %383 = vmatpush2.msra.mxu0 0.0
        %384 = vmatprep.subr.mxu0 0.0
        %385 = vmatpush2.msra.mxu0 0.0
        %386 = vmatprep.subr.mxu0 0.0
        %387 = vmatpush2.msra.mxu0 0.0
        %388 = vmatprep.subr.mxu0 0.0
        %389 = vmatpush2.msra.mxu0 0.0
        %390 = vmatprep.subr.mxu0 0.0
        %391 = vmatpush2.msra.mxu0 0.0
        %392 = vmatprep.subr.mxu0 0.0
        %393 = vmatpush2.msra.mxu0 0.0
        %394 = vmatprep.subr.mxu0 0.0
        %395 = vmatpush2.msra.mxu0 0.0
        %396 = vmatprep.subr.mxu0 0.0
        %397 = vmatpush2.msra.mxu0 0.0
        %398 = vmatprep.subr.mxu0 0.0
        %399 = vmatpush2.msra.mxu0 0.0
        %400 = vmatprep.subr.mxu0 0.0
        %401 = vmatpush2.msra.mxu0 0.0
        %402 = vmatprep.subr.mxu0 0.0
        %403 = vmatpush2.msra.mxu0 0.0
        %404 = vmatprep.subr.mxu0 0.0
        %405 = vmatpush2.msra.mxu0 0.0
        %406 = vmatprep.mubr.f32.mxu0 0.0
        %407 = vmatmul.mubr.f32.gmra.mxu0 %v337
        %v408 = vpop.f32.mrf.mxu0
        %v409 = vadd.f32 0.0, %v408
        %v410 = vpop.f32.mrf.mxu0
        %411 = vdwg.mxu0
        %v412 = vmax.f32 %v409, 0.0
        %v413 = vld [vmem:[%s3] sm:$0xff]
        %v414 = vld [vmem:[%s3 + $0x8] sm:$0xff]
        %v415 = vld [vmem:[%s3 + $0x10] sm:$0xff]
        %v416 = vld [vmem:[%s3 + $0x18] sm:$0xff]
        %v417 = vld [vmem:[%s3 + $0x20] sm:$0xff]
        %v418 = vld [vmem:[%s3 + $0x28] sm:$0xff]
        %v419 = vld [vmem:[%s3 + $0x30] sm:$0xff]
        %v420 = vld [vmem:[%s3 + $0x38] sm:$0xff]
        %v421 = vld [vmem:[%s3 + $0x40] sm:$0xff]
        %v422 = vld [vmem:[%s3 + $0x48] sm:$0xff]
        %v423 = vld [vmem:[%s3 + $0x50] sm:$0xff]
        %v424 = vld [vmem:[%s3 + $0x58] sm:$0xff]
        %v425 = vld [vmem:[%s3 + $0x60] sm:$0xff]
        %v426 = vld [vmem:[%s3 + $0x68] sm:$0xff]
        %v427 = vld [vmem:[%s3 + $0x70] sm:$0xff]
        %v428 = vld [vmem:[%s3 + $0x78] sm:$0xff]
        %v429 = vld [vmem:[%s3 + $0x80] sm:$0x1]
        %v430 = vld [vmem:[%s3 + $0x88] sm:$0x1]
        %vm431 = vcmask 531456
        %v433 = vsel %vm431, %v412, 0
        %v436 = vsel %vm257, %v429, 0
        %v439 = vsel %vm257, %v430, 0
        %441 = vmatprep.subr.mxu0 0.0
        %442 = vmatpush1.msra.mxu0 0.0
        %443 = vmatprep.subr.mxu0 0.0
        %444 = vmatpush1.msra.mxu0 0.0
        %445 = vmatprep.subr.mxu0 0.0
        %446 = vmatpush1.msra.mxu0 0.0
        %447 = vmatprep.subr.mxu0 0.0
        %448 = vmatpush1.msra.mxu0 0.0
        %449 = vmatprep.subr.mxu0 0.0
        %450 = vmatpush1.msra.mxu0 0.0
        %451 = vmatprep.subr.mxu0 0.0
        %452 = vmatpush1.msra.mxu0 0.0
        %453 = vmatprep.subr.mxu0 0.0
        %454 = vmatpush1.msra.mxu0 0.0
        %455 = vmatprep.subr.mxu0 %v439
        %456 = vmatpush1.msra.mxu0 %v436
        %457 = vmatprep.subr.mxu0 %v428
        %458 = vmatpush1.msra.mxu0 %v427
        %459 = vmatprep.subr.mxu0 %v426
        %460 = vmatpush1.msra.mxu0 %v425
        %461 = vmatprep.subr.mxu0 %v424
        %462 = vmatpush1.msra.mxu0 %v423
        %463 = vmatprep.subr.mxu0 %v422
        %464 = vmatpush1.msra.mxu0 %v421
        %465 = vmatprep.subr.mxu0 %v420
        %466 = vmatpush1.msra.mxu0 %v419
        %467 = vmatprep.subr.mxu0 %v418
        %468 = vmatpush1.msra.mxu0 %v417
        %469 = vmatprep.subr.mxu0 %v416
        %470 = vmatpush1.msra.mxu0 %v415
        %471 = vmatprep.subr.mxu0 %v414
        %472 = vmatpush1.msra.mxu0 %v413
        %473 = vmatprep.subr.mxu0 0.0
        %474 = vmatpush2.msra.mxu0 0.0
        %475 = vmatprep.subr.mxu0 0.0
        %476 = vmatpush2.msra.mxu0 0.0
        %477 = vmatprep.subr.mxu0 0.0
        %478 = vmatpush2.msra.mxu0 0.0
        %479 = vmatprep.subr.mxu0 0.0
        %480 = vmatpush2.msra.mxu0 0.0
        %481 = vmatprep.subr.mxu0 0.0
        %482 = vmatpush2.msra.mxu0 0.0
        %483 = vmatprep.subr.mxu0 0.0
        %484 = vmatpush2.msra.mxu0 0.0
        %485 = vmatprep.subr.mxu0 0.0
        %486 = vmatpush2.msra.mxu0 0.0
        %487 = vmatprep.subr.mxu0 0.0
        %488 = vmatpush2.msra.mxu0 0.0
        %489 = vmatprep.subr.mxu0 0.0
        %490 = vmatpush2.msra.mxu0 0.0
        %491 = vmatprep.subr.mxu0 0.0
        %492 = vmatpush2.msra.mxu0 0.0
        %493 = vmatprep.subr.mxu0 0.0
        %494 = vmatpush2.msra.mxu0 0.0
        %495 = vmatprep.subr.mxu0 0.0
        %496 = vmatpush2.msra.mxu0 0.0
        %497 = vmatprep.subr.mxu0 0.0
        %498 = vmatpush2.msra.mxu0 0.0
        %499 = vmatprep.subr.mxu0 0.0
        %500 = vmatpush2.msra.mxu0 0.0
        %501 = vmatprep.subr.mxu0 0.0
        %502 = vmatpush2.msra.mxu0 0.0
        %503 = vmatprep.subr.mxu0 0.0
        %504 = vmatpush2.msra.mxu0 0.0
        %505 = vmatprep.mubr.f32.mxu0 0.0
        %506 = vmatmul.mubr.f32.gmra.mxu0 %v433
        %v507 = vpop.f32.mrf.mxu0
        %v508 = vadd.f32 0.0, %v507
        %v509 = vpop.f32.mrf.mxu0
        %v510 = vadd.f32 0.0, %v509
        %511 = vdwg.mxu0
        %v512 = vmax.f32 %v508, 0.0
        %v513 = vmax.f32 %v510, 0.0
        %v514 = vld [vmem:[%s4] sm:$0xff]
        %v515 = vld [vmem:[%s4 + $0x8] sm:$0xff]
        %v516 = vld [vmem:[%s4 + $0x10] sm:$0xff]
        %v517 = vld [vmem:[%s4 + $0x18] sm:$0xff]
        %v518 = vld [vmem:[%s4 + $0x20] sm:$0xff]
        %v519 = vld [vmem:[%s4 + $0x28] sm:$0xff]
        %v520 = vld [vmem:[%s4 + $0x30] sm:$0xff]
        %v521 = vld [vmem:[%s4 + $0x38] sm:$0xff]
        %v522 = vld [vmem:[%s4 + $0x40] sm:$0xff]
        %v523 = vld [vmem:[%s4 + $0x48] sm:$0xff]
        %v524 = vld [vmem:[%s4 + $0x50] sm:$0xff]
        %v525 = vld [vmem:[%s4 + $0x58] sm:$0xff]
        %v526 = vld [vmem:[%s4 + $0x60] sm:$0xff]
        %v527 = vld [vmem:[%s4 + $0x68] sm:$0xff]
        %v528 = vld [vmem:[%s4 + $0x70] sm:$0xff]
        %v529 = vld [vmem:[%s4 + $0x78] sm:$0xff]
        %v530 = vld [vmem:[%s4 + $0x80] sm:$0xff]
        %v531 = vld [vmem:[%s4 + $0x88] sm:$0xff]
        %v532 = vld [vmem:[%s4 + $0x90] sm:$0xff]
        %v533 = vld [vmem:[%s4 + $0x98] sm:$0xff]
        %v534 = vld [vmem:[%s4 + $0xa0] sm:$0xff]
        %v535 = vld [vmem:[%s4 + $0xa8] sm:$0xff]
        %v536 = vld [vmem:[%s4 + $0xb0] sm:$0xff]
        %v537 = vld [vmem:[%s4 + $0xb8] sm:$0xff]
        %v538 = vld [vmem:[%s4 + $0xc0] sm:$0xff]
        %v539 = vld [vmem:[%s4 + $0xc8] sm:$0xff]
        %v540 = vld [vmem:[%s4 + $0xd0] sm:$0xff]
        %v541 = vld [vmem:[%s4 + $0xd8] sm:$0xff]
        %v542 = vld [vmem:[%s4 + $0xe0] sm:$0xff]
        %v543 = vld [vmem:[%s4 + $0xe8] sm:$0xff]
        %v544 = vld [vmem:[%s4 + $0xf0] sm:$0xff]
        %v545 = vld [vmem:[%s4 + $0xf8] sm:$0xff]
        %v546 = vld [vmem:[%s4 + $0x100] sm:$0xff]
        %v547 = vld [vmem:[%s4 + $0x108] sm:$0xff]
        %v548 = vld [vmem:[%s4 + $0x110] sm:$0xff]
        %v549 = vld [vmem:[%s4 + $0x118] sm:$0xff]
        %v550 = vld [vmem:[%s4 + $0x120] sm:$0xff]
        %v551 = vld [vmem:[%s4 + $0x128] sm:$0xff]
        %v552 = vld [vmem:[%s4 + $0x130] sm:$0xff]
        %v553 = vld [vmem:[%s4 + $0x138] sm:$0xff]
        %v554 = vld [vmem:[%s4 + $0x140] sm:$0xff]
        %v555 = vld [vmem:[%s4 + $0x148] sm:$0xff]
        %v556 = vld [vmem:[%s4 + $0x150] sm:$0xff]
        %v557 = vld [vmem:[%s4 + $0x158] sm:$0xff]
        %v558 = vld [vmem:[%s4 + $0x160] sm:$0xff]
        %v559 = vld [vmem:[%s4 + $0x168] sm:$0xff]
        %v560 = vld [vmem:[%s4 + $0x170] sm:$0xff]
        %v561 = vld [vmem:[%s4 + $0x178] sm:$0xff]
        %v562 = vld [vmem:[%s4 + $0x180] sm:$0xff]
        %v563 = vld [vmem:[%s4 + $0x188] sm:$0xff]
        %v564 = vld [vmem:[%s4 + $0x190] sm:$0xff]
        %v565 = vld [vmem:[%s4 + $0x198] sm:$0xff]
        %v566 = vld [vmem:[%s4 + $0x1a0] sm:$0xff]
        %v567 = vld [vmem:[%s4 + $0x1a8] sm:$0xff]
        %v568 = vld [vmem:[%s4 + $0x1b0] sm:$0xff]
        %v569 = vld [vmem:[%s4 + $0x1b8] sm:$0xff]
        %v570 = vld [vmem:[%s4 + $0x1c0] sm:$0xff]
        %v571 = vld [vmem:[%s4 + $0x1c8] sm:$0xff]
        %v572 = vld [vmem:[%s4 + $0x1d0] sm:$0xff]
        %v573 = vld [vmem:[%s4 + $0x1d8] sm:$0xff]
        %v574 = vld [vmem:[%s4 + $0x1e0] sm:$0xff]
        %v575 = vld [vmem:[%s4 + $0x1e8] sm:$0xff]
        %v576 = vld [vmem:[%s4 + $0x1f0] sm:$0xff]
        %v577 = vld [vmem:[%s4 + $0x1f8] sm:$0xff]
        %v578 = vld [vmem:[%s4 + $0x200] sm:$0xff]
        %v579 = vld [vmem:[%s4 + $0x208] sm:$0xff]
        %v580 = vld [vmem:[%s4 + $0x210] sm:$0xff]
        %v581 = vld [vmem:[%s4 + $0x218] sm:$0xff]
        %v582 = vld [vmem:[%s4 + $0x220] sm:$0xff]
        %v583 = vld [vmem:[%s4 + $0x228] sm:$0xff]
        %v584 = vld [vmem:[%s4 + $0x230] sm:$0xff]
        %v585 = vld [vmem:[%s4 + $0x238] sm:$0xff]
        %v586 = vld [vmem:[%s4 + $0x240] sm:$0xff]
        %v587 = vld [vmem:[%s4 + $0x248] sm:$0xff]
        %v588 = vld [vmem:[%s4 + $0x250] sm:$0xff]
        %v589 = vld [vmem:[%s4 + $0x258] sm:$0xff]
        %v590 = vld [vmem:[%s4 + $0x260] sm:$0xff]
        %v591 = vld [vmem:[%s4 + $0x268] sm:$0xff]
        %v592 = vld [vmem:[%s4 + $0x270] sm:$0xff]
        %v593 = vld [vmem:[%s4 + $0x278] sm:$0xff]
        %v594 = vld [vmem:[%s4 + $0x280] sm:$0x1]
        %v595 = vld [vmem:[%s4 + $0x288] sm:$0x1]
        %v596 = vld [vmem:[%s4 + $0x290] sm:$0x1]
        %v597 = vld [vmem:[%s4 + $0x298] sm:$0x1]
        %v598 = vld [vmem:[%s4 + $0x2a0] sm:$0x1]
        %vm599 = vcmask 7168
        %v601 = vsel %vm599, %v513, 0
        %v604 = vsel %vm257, %v594, 0
        %v607 = vsel %vm257, %v595, 0
        %v610 = vsel %vm257, %v596, 0
        %v613 = vsel %vm257, %v597, 0
        %v616 = vsel %vm257, %v598, 0
        %618 = vmatprep.subr.mxu0 %v590
        %619 = vmatpush1.msra.mxu0 %v589
        %620 = vmatprep.subr.mxu0 %v585
        %621 = vmatpush1.msra.mxu0 %v584
        %622 = vmatprep.subr.mxu0 %v580
        %623 = vmatpush1.msra.mxu0 %v579
        %624 = vmatprep.subr.mxu0 %v575
        %625 = vmatpush1.msra.mxu0 %v574
        %626 = vmatprep.subr.mxu0 %v570
        %627 = vmatpush1.msra.mxu0 %v569
        %628 = vmatprep.subr.mxu0 %v565
        %629 = vmatpush1.msra.mxu0 %v564
        %630 = vmatprep.subr.mxu0 %v560
        %631 = vmatpush1.msra.mxu0 %v559
        %632 = vmatprep.subr.mxu0 %v555
        %633 = vmatpush1.msra.mxu0 %v554
        %634 = vmatprep.subr.mxu0 %v550
        %635 = vmatpush1.msra.mxu0 %v549
        %636 = vmatprep.subr.mxu0 %v545
        %637 = vmatpush1.msra.mxu0 %v544
        %638 = vmatprep.subr.mxu0 %v540
        %639 = vmatpush1.msra.mxu0 %v539
        %640 = vmatprep.subr.mxu0 %v535
        %641 = vmatpush1.msra.mxu0 %v534
        %642 = vmatprep.subr.mxu0 %v530
        %643 = vmatpush1.msra.mxu0 %v529
        %644 = vmatprep.subr.mxu0 %v525
        %645 = vmatpush1.msra.mxu0 %v524
        %646 = vmatprep.subr.mxu0 %v520
        %647 = vmatpush1.msra.mxu0 %v519
        %648 = vmatprep.subr.mxu0 %v515
        %649 = vmatpush1.msra.mxu0 %v514
        %650 = vmatprep.subr.mxu0 0.0
        %651 = vmatpush2.msra.mxu0 0.0
        %652 = vmatprep.subr.mxu0 0.0
        %653 = vmatpush2.msra.mxu0 0.0
        %654 = vmatprep.subr.mxu0 0.0
        %655 = vmatpush2.msra.mxu0 0.0
        %656 = vmatprep.subr.mxu0 0.0
        %657 = vmatpush2.msra.mxu0 0.0
        %658 = vmatprep.subr.mxu0 0.0
        %659 = vmatpush2.msra.mxu0 0.0
        %660 = vmatprep.subr.mxu0 0.0
        %661 = vmatpush2.msra.mxu0 0.0
        %662 = vmatprep.subr.mxu0 0.0
        %663 = vmatpush2.msra.mxu0 0.0
        %664 = vmatprep.subr.mxu0 0.0
        %665 = vmatpush2.msra.mxu0 0.0
        %666 = vmatprep.subr.mxu0 0.0
        %667 = vmatpush2.msra.mxu0 0.0
        %668 = vmatprep.subr.mxu0 0.0
        %669 = vmatpush2.msra.mxu0 0.0
        %670 = vmatprep.subr.mxu0 0.0
        %671 = vmatpush2.msra.mxu0 0.0
        %672 = vmatprep.subr.mxu0 0.0
        %673 = vmatpush2.msra.mxu0 0.0
        %674 = vmatprep.subr.mxu0 0.0
        %675 = vmatpush2.msra.mxu0 0.0
        %676 = vmatprep.subr.mxu0 0.0
        %677 = vmatpush2.msra.mxu0 0.0
        %678 = vmatprep.subr.mxu0 0.0
        %679 = vmatpush2.msra.mxu0 0.0
        %680 = vmatprep.subr.mxu0 %v607
        %681 = vmatpush2.msra.mxu0 %v604
        %682 = vmatprep.mubr.f32.mxu0 %v601
        %683 = vmatmul.mubr.f32.gmra.mxu0 %v512
        %v684 = vpop.f32.mrf.mxu0
        %v685 = vadd.f32 0.0, %v684
        %v686 = vpop.f32.mrf.mxu0
        %v687 = vadd.f32 0.0, %v686
        %688 = vdwg.mxu0
        %689 = vmatprep.subr.mxu0 %v592
        %690 = vmatpush1.msra.mxu0 %v591
        %691 = vmatprep.subr.mxu0 %v587
        %692 = vmatpush1.msra.mxu0 %v586
        %693 = vmatprep.subr.mxu0 %v582
        %694 = vmatpush1.msra.mxu0 %v581
        %695 = vmatprep.subr.mxu0 %v577
        %696 = vmatpush1.msra.mxu0 %v576
        %697 = vmatprep.subr.mxu0 %v572
        %698 = vmatpush1.msra.mxu0 %v571
        %699 = vmatprep.subr.mxu0 %v567
        %700 = vmatpush1.msra.mxu0 %v566
        %701 = vmatprep.subr.mxu0 %v562
        %702 = vmatpush1.msra.mxu0 %v561
        %703 = vmatprep.subr.mxu0 %v557
        %704 = vmatpush1.msra.mxu0 %v556
        %705 = vmatprep.subr.mxu0 %v552
        %706 = vmatpush1.msra.mxu0 %v551
        %707 = vmatprep.subr.mxu0 %v547
        %708 = vmatpush1.msra.mxu0 %v546
        %709 = vmatprep.subr.mxu0 %v542
        %710 = vmatpush1.msra.mxu0 %v541
        %711 = vmatprep.subr.mxu0 %v537
        %712 = vmatpush1.msra.mxu0 %v536
        %713 = vmatprep.subr.mxu0 %v532
        %714 = vmatpush1.msra.mxu0 %v531
        %715 = vmatprep.subr.mxu0 %v527
        %716 = vmatpush1.msra.mxu0 %v526
        %717 = vmatprep.subr.mxu0 %v522
        %718 = vmatpush1.msra.mxu0 %v521
        %719 = vmatprep.subr.mxu0 %v517
        %720 = vmatpush1.msra.mxu0 %v516
        %721 = vmatprep.subr.mxu0 0.0
        %722 = vmatpush2.msra.mxu0 0.0
        %723 = vmatprep.subr.mxu0 0.0
        %724 = vmatpush2.msra.mxu0 0.0
        %725 = vmatprep.subr.mxu0 0.0
        %726 = vmatpush2.msra.mxu0 0.0
        %727 = vmatprep.subr.mxu0 0.0
        %728 = vmatpush2.msra.mxu0 0.0
        %729 = vmatprep.subr.mxu0 0.0
        %730 = vmatpush2.msra.mxu0 0.0
        %731 = vmatprep.subr.mxu0 0.0
        %732 = vmatpush2.msra.mxu0 0.0
        %733 = vmatprep.subr.mxu0 0.0
        %734 = vmatpush2.msra.mxu0 0.0
        %735 = vmatprep.subr.mxu0 0.0
        %736 = vmatpush2.msra.mxu0 0.0
        %737 = vmatprep.subr.mxu0 0.0
        %738 = vmatpush2.msra.mxu0 0.0
        %739 = vmatprep.subr.mxu0 0.0
        %740 = vmatpush2.msra.mxu0 0.0
        %741 = vmatprep.subr.mxu0 0.0
        %742 = vmatpush2.msra.mxu0 0.0
        %743 = vmatprep.subr.mxu0 0.0
        %744 = vmatpush2.msra.mxu0 0.0
        %745 = vmatprep.subr.mxu0 0.0
        %746 = vmatpush2.msra.mxu0 0.0
        %747 = vmatprep.subr.mxu0 0.0
        %748 = vmatpush2.msra.mxu0 0.0
        %749 = vmatprep.subr.mxu0 0.0
        %750 = vmatpush2.msra.mxu0 0.0
        %751 = vmatprep.subr.mxu0 %v613
        %752 = vmatpush2.msra.mxu0 %v610
        %753 = vmatprep.mubr.f32.mxu0 %v601
        %754 = vmatmul.mubr.f32.gmra.mxu0 %v512
        %v755 = vpop.f32.mrf.mxu0
        %v756 = vadd.f32 0.0, %v755
        %v757 = vpop.f32.mrf.mxu0
        %v758 = vadd.f32 0.0, %v757
        %759 = vdwg.mxu0
        %760 = vmatprep.subr.mxu0 0.0
        %761 = vmatpush1.msra.mxu0 %v593
        %762 = vmatprep.subr.mxu0 0.0
        %763 = vmatpush1.msra.mxu0 %v588
        %764 = vmatprep.subr.mxu0 0.0
        %765 = vmatpush1.msra.mxu0 %v583
        %766 = vmatprep.subr.mxu0 0.0
        %767 = vmatpush1.msra.mxu0 %v578
        %768 = vmatprep.subr.mxu0 0.0
        %769 = vmatpush1.msra.mxu0 %v573
        %770 = vmatprep.subr.mxu0 0.0
        %771 = vmatpush1.msra.mxu0 %v568
        %772 = vmatprep.subr.mxu0 0.0
        %773 = vmatpush1.msra.mxu0 %v563
        %774 = vmatprep.subr.mxu0 0.0
        %775 = vmatpush1.msra.mxu0 %v558
        %776 = vmatprep.subr.mxu0 0.0
        %777 = vmatpush1.msra.mxu0 %v553
        %778 = vmatprep.subr.mxu0 0.0
        %779 = vmatpush1.msra.mxu0 %v548
        %780 = vmatprep.subr.mxu0 0.0
        %781 = vmatpush1.msra.mxu0 %v543
        %782 = vmatprep.subr.mxu0 0.0
        %783 = vmatpush1.msra.mxu0 %v538
        %784 = vmatprep.subr.mxu0 0.0
        %785 = vmatpush1.msra.mxu0 %v533
        %786 = vmatprep.subr.mxu0 0.0
        %787 = vmatpush1.msra.mxu0 %v528
        %788 = vmatprep.subr.mxu0 0.0
        %789 = vmatpush1.msra.mxu0 %v523
        %790 = vmatprep.subr.mxu0 0.0
        %791 = vmatpush1.msra.mxu0 %v518
        %792 = vmatprep.subr.mxu0 0.0
        %793 = vmatpush2.msra.mxu0 0.0
        %794 = vmatprep.subr.mxu0 0.0
        %795 = vmatpush2.msra.mxu0 0.0
        %796 = vmatprep.subr.mxu0 0.0
        %797 = vmatpush2.msra.mxu0 0.0
        %798 = vmatprep.subr.mxu0 0.0
        %799 = vmatpush2.msra.mxu0 0.0
        %800 = vmatprep.subr.mxu0 0.0
        %801 = vmatpush2.msra.mxu0 0.0
        %802 = vmatprep.subr.mxu0 0.0
        %803 = vmatpush2.msra.mxu0 0.0
        %804 = vmatprep.subr.mxu0 0.0
        %805 = vmatpush2.msra.mxu0 0.0
        %806 = vmatprep.subr.mxu0 0.0
        %807 = vmatpush2.msra.mxu0 0.0
        %808 = vmatprep.subr.mxu0 0.0
        %809 = vmatpush2.msra.mxu0 0.0
        %810 = vmatprep.subr.mxu0 0.0
        %811 = vmatpush2.msra.mxu0 0.0
        %812 = vmatprep.subr.mxu0 0.0
        %813 = vmatpush2.msra.mxu0 0.0
        %814 = vmatprep.subr.mxu0 0.0
        %815 = vmatpush2.msra.mxu0 0.0
        %816 = vmatprep.subr.mxu0 0.0
        %817 = vmatpush2.msra.mxu0 0.0
        %818 = vmatprep.subr.mxu0 0.0
        %819 = vmatpush2.msra.mxu0 0.0
        %820 = vmatprep.subr.mxu0 0.0
        %821 = vmatpush2.msra.mxu0 0.0
        %822 = vmatprep.subr.mxu0 0.0
        %823 = vmatpush2.msra.mxu0 %v616
        %824 = vmatprep.mubr.f32.mxu0 %v601
        %825 = vmatmul.mubr.f32.gmra.mxu0 %v512
        %v826 = vpop.f32.mrf.mxu0
        %v827 = vadd.f32 0.0, %v826
        %v828 = vpop.f32.mrf.mxu0
        %829 = vdwg.mxu0
        %v830 = vmax.f32 %v685, 0.0
        %v831 = vmax.f32 %v687, 0.0
        %v832 = vmax.f32 %v756, 0.0
        %v833 = vmax.f32 %v758, 0.0
        %v834 = vmax.f32 %v827, 0.0
        %v835 = vld [vmem:[%s5] sm:$0xff]
        %v836 = vld [vmem:[%s5 + $0x8] sm:$0xff]
        %v837 = vld [vmem:[%s5 + $0x10] sm:$0xff]
        %v838 = vld [vmem:[%s5 + $0x18] sm:$0xff]
        %v839 = vld [vmem:[%s5 + $0x20] sm:$0xff]
        %v840 = vld [vmem:[%s5 + $0x28] sm:$0xff]
        %v841 = vld [vmem:[%s5 + $0x30] sm:$0xff]
        %v842 = vld [vmem:[%s5 + $0x38] sm:$0xff]
        %v843 = vld [vmem:[%s5 + $0x40] sm:$0xff]
        %v844 = vld [vmem:[%s5 + $0x48] sm:$0xff]
        %v845 = vld [vmem:[%s5 + $0x50] sm:$0xff]
        %v846 = vld [vmem:[%s5 + $0x58] sm:$0xff]
        %v847 = vld [vmem:[%s5 + $0x60] sm:$0xff]
        %v848 = vld [vmem:[%s5 + $0x68] sm:$0xff]
        %v849 = vld [vmem:[%s5 + $0x70] sm:$0xff]
        %v850 = vld [vmem:[%s5 + $0x78] sm:$0xff]
        %v851 = vld [vmem:[%s5 + $0x80] sm:$0xff]
        %v852 = vld [vmem:[%s5 + $0x88] sm:$0xff]
        %v853 = vld [vmem:[%s5 + $0x90] sm:$0xff]
        %v854 = vld [vmem:[%s5 + $0x98] sm:$0xff]
        %v855 = vld [vmem:[%s5 + $0xa0] sm:$0xff]
        %v856 = vld [vmem:[%s5 + $0xa8] sm:$0xff]
        %v857 = vld [vmem:[%s5 + $0xb0] sm:$0xff]
        %v858 = vld [vmem:[%s5 + $0xb8] sm:$0xff]
        %v859 = vld [vmem:[%s5 + $0xc0] sm:$0xff]
        %v860 = vld [vmem:[%s5 + $0xc8] sm:$0xff]
        %v861 = vld [vmem:[%s5 + $0xd0] sm:$0xff]
        %v862 = vld [vmem:[%s5 + $0xd8] sm:$0xff]
        %v863 = vld [vmem:[%s5 + $0xe0] sm:$0xff]
        %v864 = vld [vmem:[%s5 + $0xe8] sm:$0xff]
        %v865 = vld [vmem:[%s5 + $0xf0] sm:$0xff]
        %v866 = vld [vmem:[%s5 + $0xf8] sm:$0xff]
        %v867 = vld [vmem:[%s5 + $0x100] sm:$0xff]
        %v868 = vld [vmem:[%s5 + $0x108] sm:$0xff]
        %v869 = vld [vmem:[%s5 + $0x110] sm:$0xff]
        %v870 = vld [vmem:[%s5 + $0x118] sm:$0xff]
        %v871 = vld [vmem:[%s5 + $0x120] sm:$0xff]
        %v872 = vld [vmem:[%s5 + $0x128] sm:$0xff]
        %v873 = vld [vmem:[%s5 + $0x130] sm:$0xff]
        %v874 = vld [vmem:[%s5 + $0x138] sm:$0xff]
        %v875 = vld [vmem:[%s5 + $0x140] sm:$0xff]
        %v876 = vld [vmem:[%s5 + $0x148] sm:$0xff]
        %v877 = vld [vmem:[%s5 + $0x150] sm:$0xff]
        %v878 = vld [vmem:[%s5 + $0x158] sm:$0xff]
        %v879 = vld [vmem:[%s5 + $0x160] sm:$0xff]
        %v880 = vld [vmem:[%s5 + $0x168] sm:$0xff]
        %v881 = vld [vmem:[%s5 + $0x170] sm:$0xff]
        %v882 = vld [vmem:[%s5 + $0x178] sm:$0xff]
        %v883 = vld [vmem:[%s5 + $0x180] sm:$0xff]
        %v884 = vld [vmem:[%s5 + $0x188] sm:$0xff]
        %v885 = vld [vmem:[%s5 + $0x190] sm:$0xff]
        %v886 = vld [vmem:[%s5 + $0x198] sm:$0xff]
        %v887 = vld [vmem:[%s5 + $0x1a0] sm:$0xff]
        %v888 = vld [vmem:[%s5 + $0x1a8] sm:$0xff]
        %v889 = vld [vmem:[%s5 + $0x1b0] sm:$0xff]
        %v890 = vld [vmem:[%s5 + $0x1b8] sm:$0xff]
        %v891 = vld [vmem:[%s5 + $0x1c0] sm:$0xff]
        %v892 = vld [vmem:[%s5 + $0x1c8] sm:$0xff]
        %v893 = vld [vmem:[%s5 + $0x1d0] sm:$0xff]
        %v894 = vld [vmem:[%s5 + $0x1d8] sm:$0xff]
        %v895 = vld [vmem:[%s5 + $0x1e0] sm:$0xff]
        %v896 = vld [vmem:[%s5 + $0x1e8] sm:$0xff]
        %v897 = vld [vmem:[%s5 + $0x1f0] sm:$0xff]
        %v898 = vld [vmem:[%s5 + $0x1f8] sm:$0xff]
        %v899 = vld [vmem:[%s5 + $0x200] sm:$0xff]
        %v900 = vld [vmem:[%s5 + $0x208] sm:$0xff]
        %v901 = vld [vmem:[%s5 + $0x210] sm:$0xff]
        %v902 = vld [vmem:[%s5 + $0x218] sm:$0xff]
        %v903 = vld [vmem:[%s5 + $0x220] sm:$0xff]
        %v904 = vld [vmem:[%s5 + $0x228] sm:$0xff]
        %v905 = vld [vmem:[%s5 + $0x230] sm:$0xff]
        %v906 = vld [vmem:[%s5 + $0x238] sm:$0xff]
        %v907 = vld [vmem:[%s5 + $0x240] sm:$0xff]
        %v908 = vld [vmem:[%s5 + $0x248] sm:$0xff]
        %v909 = vld [vmem:[%s5 + $0x250] sm:$0xff]
        %v910 = vld [vmem:[%s5 + $0x258] sm:$0xff]
        %v911 = vld [vmem:[%s5 + $0x260] sm:$0xff]
        %v912 = vld [vmem:[%s5 + $0x268] sm:$0xff]
        %v913 = vld [vmem:[%s5 + $0x270] sm:$0xff]
        %v914 = vld [vmem:[%s5 + $0x278] sm:$0xff]
        %v915 = vld [vmem:[%s5 + $0x280] sm:$0xff]
        %v916 = vld [vmem:[%s5 + $0x288] sm:$0xff]
        %v917 = vld [vmem:[%s5 + $0x290] sm:$0xff]
        %v918 = vld [vmem:[%s5 + $0x298] sm:$0xff]
        %v919 = vld [vmem:[%s5 + $0x2a0] sm:$0xff]
        %v920 = vld [vmem:[%s5 + $0x2a8] sm:$0xff]
        %v921 = vld [vmem:[%s5 + $0x2b0] sm:$0xff]
        %v922 = vld [vmem:[%s5 + $0x2b8] sm:$0xff]
        %v923 = vld [vmem:[%s5 + $0x2c0] sm:$0xff]
        %v924 = vld [vmem:[%s5 + $0x2c8] sm:$0xff]
        %v925 = vld [vmem:[%s5 + $0x2d0] sm:$0xff]
        %v926 = vld [vmem:[%s5 + $0x2d8] sm:$0xff]
        %v927 = vld [vmem:[%s5 + $0x2e0] sm:$0xff]
        %v928 = vld [vmem:[%s5 + $0x2e8] sm:$0xff]
        %v929 = vld [vmem:[%s5 + $0x2f0] sm:$0xff]
        %v930 = vld [vmem:[%s5 + $0x2f8] sm:$0xff]
        %v931 = vld [vmem:[%s5 + $0x300] sm:$0xff]
        %v932 = vld [vmem:[%s5 + $0x308] sm:$0xff]
        %v933 = vld [vmem:[%s5 + $0x310] sm:$0xff]
        %v934 = vld [vmem:[%s5 + $0x318] sm:$0xff]
        %v935 = vld [vmem:[%s5 + $0x320] sm:$0xff]
        %v936 = vld [vmem:[%s5 + $0x328] sm:$0xff]
        %v937 = vld [vmem:[%s5 + $0x330] sm:$0xff]
        %v938 = vld [vmem:[%s5 + $0x338] sm:$0xff]
        %v939 = vld [vmem:[%s5 + $0x340] sm:$0xff]
        %v940 = vld [vmem:[%s5 + $0x348] sm:$0xff]
        %v941 = vld [vmem:[%s5 + $0x350] sm:$0xff]
        %v942 = vld [vmem:[%s5 + $0x358] sm:$0xff]
        %v943 = vld [vmem:[%s5 + $0x360] sm:$0xff]
        %v944 = vld [vmem:[%s5 + $0x368] sm:$0xff]
        %v945 = vld [vmem:[%s5 + $0x370] sm:$0xff]
        %v946 = vld [vmem:[%s5 + $0x378] sm:$0xff]
        %v947 = vld [vmem:[%s5 + $0x380] sm:$0xff]
        %v948 = vld [vmem:[%s5 + $0x388] sm:$0xff]
        %v949 = vld [vmem:[%s5 + $0x390] sm:$0xff]
        %v950 = vld [vmem:[%s5 + $0x398] sm:$0xff]
        %v951 = vld [vmem:[%s5 + $0x3a0] sm:$0xff]
        %v952 = vld [vmem:[%s5 + $0x3a8] sm:$0xff]
        %v953 = vld [vmem:[%s5 + $0x3b0] sm:$0xff]
        %v954 = vld [vmem:[%s5 + $0x3b8] sm:$0xff]
        %v955 = vld [vmem:[%s5 + $0x3c0] sm:$0xff]
        %v956 = vld [vmem:[%s5 + $0x3c8] sm:$0xff]
        %v957 = vld [vmem:[%s5 + $0x3d0] sm:$0xff]
        %v958 = vld [vmem:[%s5 + $0x3d8] sm:$0xff]
        %v959 = vld [vmem:[%s5 + $0x3e0] sm:$0xff]
        %v960 = vld [vmem:[%s5 + $0x3e8] sm:$0xff]
        %v961 = vld [vmem:[%s5 + $0x3f0] sm:$0xff]
        %v962 = vld [vmem:[%s5 + $0x3f8] sm:$0xff]
        %v963 = vld [vmem:[%s5 + $0x400] sm:$0x1]
        %v964 = vld [vmem:[%s5 + $0x408] sm:$0x1]
        %v966 = vsel %vm599, %v834, 0
        %v969 = vsel %vm257, %v963, 0
        %v972 = vsel %vm257, %v964, 0
        %974 = vmatprep.subr.mxu0 %v866
        %975 = vmatpush1.msra.mxu0 %v865
        %976 = vmatprep.subr.mxu0 %v864
        %977 = vmatpush1.msra.mxu0 %v863
        %978 = vmatprep.subr.mxu0 %v862
        %979 = vmatpush1.msra.mxu0 %v861
        %980 = vmatprep.subr.mxu0 %v860
        %981 = vmatpush1.msra.mxu0 %v859
        %982 = vmatprep.subr.mxu0 %v858
        %983 = vmatpush1.msra.mxu0 %v857
        %984 = vmatprep.subr.mxu0 %v856
        %985 = vmatpush1.msra.mxu0 %v855
        %986 = vmatprep.subr.mxu0 %v854
        %987 = vmatpush1.msra.mxu0 %v853
        %988 = vmatprep.subr.mxu0 %v852
        %989 = vmatpush1.msra.mxu0 %v851
        %990 = vmatprep.subr.mxu0 %v850
        %991 = vmatpush1.msra.mxu0 %v849
        %992 = vmatprep.subr.mxu0 %v848
        %993 = vmatpush1.msra.mxu0 %v847
        %994 = vmatprep.subr.mxu0 %v846
        %995 = vmatpush1.msra.mxu0 %v845
        %996 = vmatprep.subr.mxu0 %v844
        %997 = vmatpush1.msra.mxu0 %v843
        %998 = vmatprep.subr.mxu0 %v842
        %999 = vmatpush1.msra.mxu0 %v841
        %1000 = vmatprep.subr.mxu0 %v840
        %1001 = vmatpush1.msra.mxu0 %v839
        %1002 = vmatprep.subr.mxu0 %v838
        %1003 = vmatpush1.msra.mxu0 %v837
        %1004 = vmatprep.subr.mxu0 %v836
        %1005 = vmatpush1.msra.mxu0 %v835
        %1006 = vmatprep.subr.mxu0 %v898
        %1007 = vmatpush2.msra.mxu0 %v897
        %1008 = vmatprep.subr.mxu0 %v896
        %1009 = vmatpush2.msra.mxu0 %v895
        %1010 = vmatprep.subr.mxu0 %v894
        %1011 = vmatpush2.msra.mxu0 %v893
        %1012 = vmatprep.subr.mxu0 %v892
        %1013 = vmatpush2.msra.mxu0 %v891
        %1014 = vmatprep.subr.mxu0 %v890
        %1015 = vmatpush2.msra.mxu0 %v889
        %1016 = vmatprep.subr.mxu0 %v888
        %1017 = vmatpush2.msra.mxu0 %v887
        %1018 = vmatprep.subr.mxu0 %v886
        %1019 = vmatpush2.msra.mxu0 %v885
        %1020 = vmatprep.subr.mxu0 %v884
        %1021 = vmatpush2.msra.mxu0 %v883
        %1022 = vmatprep.subr.mxu0 %v882
        %1023 = vmatpush2.msra.mxu0 %v881
        %1024 = vmatprep.subr.mxu0 %v880
        %1025 = vmatpush2.msra.mxu0 %v879
        %1026 = vmatprep.subr.mxu0 %v878
        %1027 = vmatpush2.msra.mxu0 %v877
        %1028 = vmatprep.subr.mxu0 %v876
        %1029 = vmatpush2.msra.mxu0 %v875
        %1030 = vmatprep.subr.mxu0 %v874
        %1031 = vmatpush2.msra.mxu0 %v873
        %1032 = vmatprep.subr.mxu0 %v872
        %1033 = vmatpush2.msra.mxu0 %v871
        %1034 = vmatprep.subr.mxu0 %v870
        %1035 = vmatpush2.msra.mxu0 %v869
        %1036 = vmatprep.subr.mxu0 %v868
        %1037 = vmatpush2.msra.mxu0 %v867
        %1038 = vmatprep.mubr.f32.mxu0 %v831
        %1039 = vmatmul.mubr.f32.gmra.mxu0 %v830
        %v1040 = vpop.f32.mrf.mxu0
        %v1041 = vadd.f32 0.0, %v1040
        %v1042 = vpop.f32.mrf.mxu0
        %v1043 = vadd.f32 0.0, %v1042
        %1044 = vdwg.mxu0
        %1045 = vmatprep.subr.mxu0 %v930
        %1046 = vmatpush1.msra.mxu0 %v929
        %1047 = vmatprep.subr.mxu0 %v928
        %1048 = vmatpush1.msra.mxu0 %v927
        %1049 = vmatprep.subr.mxu0 %v926
        %1050 = vmatpush1.msra.mxu0 %v925
        %1051 = vmatprep.subr.mxu0 %v924
        %1052 = vmatpush1.msra.mxu0 %v923
        %1053 = vmatprep.subr.mxu0 %v922
        %1054 = vmatpush1.msra.mxu0 %v921
        %1055 = vmatprep.subr.mxu0 %v920
        %1056 = vmatpush1.msra.mxu0 %v919
        %1057 = vmatprep.subr.mxu0 %v918
        %1058 = vmatpush1.msra.mxu0 %v917
        %1059 = vmatprep.subr.mxu0 %v916
        %1060 = vmatpush1.msra.mxu0 %v915
        %1061 = vmatprep.subr.mxu0 %v914
        %1062 = vmatpush1.msra.mxu0 %v913
        %1063 = vmatprep.subr.mxu0 %v912
        %1064 = vmatpush1.msra.mxu0 %v911
        %1065 = vmatprep.subr.mxu0 %v910
        %1066 = vmatpush1.msra.mxu0 %v909
        %1067 = vmatprep.subr.mxu0 %v908
        %1068 = vmatpush1.msra.mxu0 %v907
        %1069 = vmatprep.subr.mxu0 %v906
        %1070 = vmatpush1.msra.mxu0 %v905
        %1071 = vmatprep.subr.mxu0 %v904
        %1072 = vmatpush1.msra.mxu0 %v903
        %1073 = vmatprep.subr.mxu0 %v902
        %1074 = vmatpush1.msra.mxu0 %v901
        %1075 = vmatprep.subr.mxu0 %v900
        %1076 = vmatpush1.msra.mxu0 %v899
        %1077 = vmatprep.subr.mxu0 %v962
        %1078 = vmatpush2.msra.mxu0 %v961
        %1079 = vmatprep.subr.mxu0 %v960
        %1080 = vmatpush2.msra.mxu0 %v959
        %1081 = vmatprep.subr.mxu0 %v958
        %1082 = vmatpush2.msra.mxu0 %v957
        %1083 = vmatprep.subr.mxu0 %v956
        %1084 = vmatpush2.msra.mxu0 %v955
        %1085 = vmatprep.subr.mxu0 %v954
        %1086 = vmatpush2.msra.mxu0 %v953
        %1087 = vmatprep.subr.mxu0 %v952
        %1088 = vmatpush2.msra.mxu0 %v951
        %1089 = vmatprep.subr.mxu0 %v950
        %1090 = vmatpush2.msra.mxu0 %v949
        %1091 = vmatprep.subr.mxu0 %v948
        %1092 = vmatpush2.msra.mxu0 %v947
        %1093 = vmatprep.subr.mxu0 %v946
        %1094 = vmatpush2.msra.mxu0 %v945
        %1095 = vmatprep.subr.mxu0 %v944
        %1096 = vmatpush2.msra.mxu0 %v943
        %1097 = vmatprep.subr.mxu0 %v942
        %1098 = vmatpush2.msra.mxu0 %v941
        %1099 = vmatprep.subr.mxu0 %v940
        %1100 = vmatpush2.msra.mxu0 %v939
        %1101 = vmatprep.subr.mxu0 %v938
        %1102 = vmatpush2.msra.mxu0 %v937
        %1103 = vmatprep.subr.mxu0 %v936
        %1104 = vmatpush2.msra.mxu0 %v935
        %1105 = vmatprep.subr.mxu0 %v934
        %1106 = vmatpush2.msra.mxu0 %v933
        %1107 = vmatprep.subr.mxu0 %v932
        %1108 = vmatpush2.msra.mxu0 %v931
        %1109 = vmatprep.mubr.f32.mxu0 %v833
        %1110 = vmatmul.mubr.f32.gmra.mxu0 %v832
        %v1111 = vpop.f32.mrf.mxu0
        %v1112 = vadd.f32 %v1041, %v1111
        %v1113 = vpop.f32.mrf.mxu0
        %v1114 = vadd.f32 %v1043, %v1113
        %1115 = vdwg.mxu0
        %1116 = vmatprep.subr.mxu0 0.0
        %1117 = vmatpush1.msra.mxu0 0.0
        %1118 = vmatprep.subr.mxu0 0.0
        %1119 = vmatpush1.msra.mxu0 0.0
        %1120 = vmatprep.subr.mxu0 0.0
        %1121 = vmatpush1.msra.mxu0 0.0
        %1122 = vmatprep.subr.mxu0 0.0
        %1123 = vmatpush1.msra.mxu0 0.0
        %1124 = vmatprep.subr.mxu0 0.0
        %1125 = vmatpush1.msra.mxu0 0.0
        %1126 = vmatprep.subr.mxu0 0.0
        %1127 = vmatpush1.msra.mxu0 0.0
        %1128 = vmatprep.subr.mxu0 0.0
        %1129 = vmatpush1.msra.mxu0 0.0
        %1130 = vmatprep.subr.mxu0 0.0
        %1131 = vmatpush1.msra.mxu0 0.0
        %1132 = vmatprep.subr.mxu0 0.0
        %1133 = vmatpush1.msra.mxu0 0.0
        %1134 = vmatprep.subr.mxu0 0.0
        %1135 = vmatpush1.msra.mxu0 0.0
        %1136 = vmatprep.subr.mxu0 0.0
        %1137 = vmatpush1.msra.mxu0 0.0
        %1138 = vmatprep.subr.mxu0 0.0
        %1139 = vmatpush1.msra.mxu0 0.0
        %1140 = vmatprep.subr.mxu0 0.0
        %1141 = vmatpush1.msra.mxu0 0.0
        %1142 = vmatprep.subr.mxu0 0.0
        %1143 = vmatpush1.msra.mxu0 0.0
        %1144 = vmatprep.subr.mxu0 0.0
        %1145 = vmatpush1.msra.mxu0 0.0
        %1146 = vmatprep.subr.mxu0 %v972
        %1147 = vmatpush1.msra.mxu0 %v969
        %1148 = vmatprep.subr.mxu0 0.0
        %1149 = vmatpush2.msra.mxu0 0.0
        %1150 = vmatprep.subr.mxu0 0.0
        %1151 = vmatpush2.msra.mxu0 0.0
        %1152 = vmatprep.subr.mxu0 0.0
        %1153 = vmatpush2.msra.mxu0 0.0
        %1154 = vmatprep.subr.mxu0 0.0
        %1155 = vmatpush2.msra.mxu0 0.0
        %1156 = vmatprep.subr.mxu0 0.0
        %1157 = vmatpush2.msra.mxu0 0.0
        %1158 = vmatprep.subr.mxu0 0.0
        %1159 = vmatpush2.msra.mxu0 0.0
        %1160 = vmatprep.subr.mxu0 0.0
        %1161 = vmatpush2.msra.mxu0 0.0
        %1162 = vmatprep.subr.mxu0 0.0
        %1163 = vmatpush2.msra.mxu0 0.0
        %1164 = vmatprep.subr.mxu0 0.0
        %1165 = vmatpush2.msra.mxu0 0.0
        %1166 = vmatprep.subr.mxu0 0.0
        %1167 = vmatpush2.msra.mxu0 0.0
        %1168 = vmatprep.subr.mxu0 0.0
        %1169 = vmatpush2.msra.mxu0 0.0
        %1170 = vmatprep.subr.mxu0 0.0
        %1171 = vmatpush2.msra.mxu0 0.0
        %1172 = vmatprep.subr.mxu0 0.0
        %1173 = vmatpush2.msra.mxu0 0.0
        %1174 = vmatprep.subr.mxu0 0.0
        %1175 = vmatpush2.msra.mxu0 0.0
        %1176 = vmatprep.subr.mxu0 0.0
        %1177 = vmatpush2.msra.mxu0 0.0
        %1178 = vmatprep.subr.mxu0 0.0
        %1179 = vmatpush2.msra.mxu0 0.0
        %1180 = vmatprep.mubr.f32.mxu0 0.0
        %1181 = vmatmul.mubr.f32.gmra.mxu0 %v966
        %v1182 = vpop.f32.mrf.mxu0
        %v1183 = vadd.f32 %v1112, %v1182
        %v1184 = vpop.f32.mrf.mxu0
        %v1185 = vadd.f32 %v1114, %v1184
        %1186 = vdwg.mxu0
        %v1187 = vmul.f32 %v1183, 0.5
        %v1188 = vmul.f32 %v1185, 0.5
        %v1189 = vtanh.pop %v1187
        %v1190 = vtanh.pop %v1188
        %v1191 = vmul.f32 %v1189, 0.5
        %v1192 = vmul.f32 %v1190, 0.5
        %v1193 = vadd.f32 %v1191, 0.5
        %v1194 = vadd.f32 %v1192, 0.5
        %1195 = vst [vmem:[%s242] sm:$0xff] %v1193
        %vm1196 = vcmask 523264
        %1197 = vst.msk [vmem:[%s242 + $0x8] sm:$0xff] %vm1196, %v1194
        %s1198 = sand.u32 %s159, 1
        %s1199 = scalar_lea.sflag [#allocation3], %s1198
        %s1200 = sand.u32 %s159, 1
        %s1201 = smul.addr %s1200, 16
        %s1202 = scalar_lea.vmem [#allocation2], %s1201
        // Predicated region
        $region45: #{tpu_custom_call.1} parent=43 // pred_check
          %p1203 = pneg %p169
        $region46: #{tpu_custom_call.1} parent=43 // pred_check_branch
          %1205 = sbr.rel (%p1203) target = $region48
        $region47: #{tpu_custom_call.1} parent=43 // pred_region
          %s1207 = ssub.s32 256, 256
          %1208 = vsyncadd %s1199, %s1207
          %s1209 = smul.addr %s20, 2
          %s1210 = smul.addr %s1209, 128
          %s1211 = scalar_lea.hbm %s6, %s1210
          %s1213 = sshll.u32 %s1202, 4
          %s1214 = int_to_ptr.vmem [resolvable:$true] %s1213
          %1216 = dma.vmem_to_hbm [thread:$0]  %s1214, 256, %s1211, %s1199
        $region48: #{tpu_custom_call.1} parent=43 // pred_fallthru
          _
      $region44: #{tpu_custom_call.1} parent=5 // pred_fallthru
        _
      %p1217 = scmp.le.s32.totalorder 2, %s15
      // Predicated region
      $region49: #{tpu_custom_call.1} parent=5 // pred_check
        %p1218 = pneg %p1217
      $region50: #{tpu_custom_call.1} parent=5 // pred_check_branch
        %1220 = sbr.rel (%p1218) target = $region52
      $region51: #{tpu_custom_call.1} parent=5 // pred_region
        %s1221 = ssub.s32 %s15, 2
        // Predicated region
        $region53: #{tpu_custom_call.1} parent=51 // pred_check
          %p1222 = pneg %p175
        $region54: #{tpu_custom_call.1} parent=51 // pred_check_branch
          %1224 = sbr.rel (%p1222) target = $region56
        $region55: #{tpu_custom_call.1} parent=51 // pred_region
          %s1225 = sand.u32 %s160, 1
          %s1226 = scalar_lea.sflag [#allocation3], %s1225
          %s1227 = sand.u32 %s160, 1
          %s1228 = smul.addr %s1227, 16
          %s1229 = scalar_lea.vmem [#allocation2], %s1228
          %1230 = dma.done %s1226, 256
        $region56: #{tpu_custom_call.1} parent=51 // pred_fallthru
          _
      $region52: #{tpu_custom_call.1} parent=5 // pred_fallthru
        _
    $region6: #{tpu_custom_call.1} parent=1 // loop_footer
      %s19 = sadd.s32 1, %s15
    $region7: #{tpu_custom_call.1} parent=1 // loop_footer_branch
      %14 = sbr.rel target = $region3
    $region8: #{tpu_custom_call.1} parent=1 // loop_exit
      _
    %1231 = vsyncpa [#allocation3], 1
    %s1232 = scalar_lea.sflag [#allocation3], 1
    %1233 = vsyncpa %s1232, 1

</llo_original>
